<compile_context>
chip_gen: v6e
topology: v6e:2x2x1
jax: 0.10.0
libtpu: 0.0.40
codegen_flags: <defaults>
</compile_context>

<pallas_src>
import numpy as np

import jax
import jax.numpy as jnp
from jax.experimental import pallas as pl
from jax.experimental.pallas import tpu as pltpu


# ---------------------------------------------------------------------------
# Host-side constants (mirror make_kernel + Upsample.__init__ + upfirdn2d)
# ---------------------------------------------------------------------------
def _upfirdn1d_matrix(n_in, taps, up, pad0, pad1):
    """Dense (n_out, n_in) matrix of 1-D zero-upsample -> pad -> FIR -> crop."""
    taps = np.asarray(taps, np.float64)
    K = taps.shape[0]
    n_out = n_in * up + pad0 + pad1 - K + 1          # down == 1
    assert n_out > 0, "empty upfirdn output"
    A = np.zeros((n_out, n_in), np.float64)
    for o in range(n_out):
        for t in range(K):
            a = o + t - pad0                         # index into upsampled signal
            if a % up:                               # zero-inserted sample
                continue
            i = a // up
            if 0 <= i < n_in:
                A[o, i] += taps[K - 1 - t]           # FIR applies flipped kernel
    return A


def _largest_divisor(n, cap):
    for d in range(max(1, min(n, cap)), 0, -1):
        if n % d == 0:
            return d
    return 1


def _ceil_to(v, m):
    return ((v + m - 1) // m) * m


def _plan_axis(mat, cap, t_align, k_align):
    """Tile the output rows of `mat` (n_out, n_in) and band the contraction.

    Returns (T, n_t, KB, band, idx):
      band : (n_t, T, KB) with band[t] = mat[t*T:(t+1)*T, start_t:start_t+KB]
      idx  : (n_t*KB,) gather index into the input axis, or None if n_t == 1.
    Guarantees T % t_align == 0 (or T == n_out) and KB % k_align == 0
    (or n_t == 1), as required by TPU block-layout rules.
    """
    n_out, n_in = mat.shape
    T = n_out
    if n_out > cap:
        t = (cap // t_align) * t_align
        while t >= t_align:
            if n_out % t == 0:
                T = t
                break
            t -= t_align
    n_t = n_out // T
    if n_t == 1:
        return T, 1, n_in, mat[None].copy(), None

    los, widths = [], []
    for t in range(n_t):
        sub = mat[t * T:(t + 1) * T]
        nz = np.nonzero(np.abs(sub).sum(axis=0) > 0)[0]
        lo = int(nz[0]) if nz.size else 0
        hi = int(nz[-1]) if nz.size else 0
        los.append(lo)
        widths.append(hi - lo + 1)
    KB = _ceil_to(max(widths), k_align)
    if KB >= n_in:
        # banding buys nothing (or cannot satisfy layout alignment): one tile.
        return n_out, 1, n_in, mat[None].copy(), None
    starts = [min(max(lo, 0), n_in - KB) for lo in los]
    band = np.stack([mat[t * T:(t + 1) * T, s:s + KB]
                     for t, s in enumerate(starts)])
    idx = np.concatenate([np.arange(s, s + KB) for s in starts])
    return T, n_t, KB, band, idx


# ---------------------------------------------------------------------------
# Pallas kernel: per grid step, CB images x two banded matmuls
# ---------------------------------------------------------------------------
def _make_kernel(cb, compute_dtype):
    def kernel(x_ref, aw_ref, ah_ref, o_ref):
        # x_ref : (CB, KH, KW)   banded input window (already unfolded in HBM)
        # aw_ref: (n_w, KW, TW)  resident width band matrices
        # ah_ref: (n_h, TH, KH)  resident height band matrices
        # o_ref : (CB, TH, TW)   output tile (trailing dim = full W_out tile)
        h = pl.program_id(1)
        w = pl.program_id(2)
        ah = ah_ref[h]                       # (TH, KH)
        aw = aw_ref[w]                       # (KW, TW)
        for c in range(cb):                  # static unroll over channel block
            t = jnp.dot(x_ref[c], aw, preferred_element_type=jnp.float32)
            o_ref[c] = jnp.dot(ah, t.astype(compute_dtype),
                               preferred_element_type=jnp.float32
                               ).astype(o_ref.dtype)
    return kernel


# ---------------------------------------------------------------------------
# Wrapper (forward pass of the PyTorch `Upsample` module, NCHW in / NCHW out)
# ---------------------------------------------------------------------------
def upsample2d(x, kernel=(1, 3, 3, 1), factor=2, *,
               compute_dtype=jnp.bfloat16, th_cap=256, tw_cap=512, cb_cap=8):
    """Pallas TPU equivalent of Upsample(kernel, factor).forward(x)."""
    kernel = np.asarray(kernel, np.float64)
    if kernel.ndim != 1:
        # TODO(synk): explicit non-separable 2-D FIR kernels would need a
        # sum-of-rank-1 / direct-convolution formulation; the module's
        # standard make_kernel(1-D k) path is what is implemented here.
        raise NotImplementedError("only separable (1-D) blur kernels supported")

    N, C, H, W = x.shape
    # make_kernel(k) * factor**2 == outer(taps, taps), taps = k/sum(k)*factor
    taps = kernel / kernel.sum() * factor
    K = taps.shape[0]
    p = K - factor
    pad0, pad1 = (p + 1) // 2 + factor - 1, p // 2      # Upsample.__init__ pad

    a_h = _upfirdn1d_matrix(H, taps, factor, pad0, pad1)   # (H_out, H)
    a_w = _upfirdn1d_matrix(W, taps, factor, pad0, pad1)   # (W_out, W)
    H_out, W_out = a_h.shape[0], a_w.shape[0]

    B = N * C                                             # depthwise: same FIR per channel
    # fold LF channels into the row axis (pure reshape) so small images still
    # fill a tile -> one large matmul instead of many tiny ones per step.
    LF = _largest_divisor(B, max(1, th_cap // max(1, H_out)))
    Bk = B // LF
    a_h_tall = np.kron(np.eye(LF), a_h) if LF > 1 else a_h  # (LF*H_out, LF*H)

    # banded tiling of both axes (static windows, unfolded host-side)
    TH, n_h, KH, ah_band, ridx = _plan_axis(a_h_tall, th_cap, 8, 8)
    TW, n_w, KW, aw_band, cidx = _plan_axis(a_w, tw_cap, 128, 128)
    HT_out = LF * H_out

    # channel block per grid step (static unroll), sized by per-step footprint
    out_isz = jnp.dtype(x.dtype).itemsize
    c_isz = jnp.dtype(compute_dtype).itemsize
    cap = max(1, min(cb_cap,
                     (2 << 20) // max(1, TH * TW * out_isz),
                     (2 << 20) // max(1, KH * KW * c_isz)))
    CB = _largest_divisor(Bk, cap)
    NB = Bk // CB

    # host/XLA data prep: reshape (free), cast to compute dtype, unfold the
    # banded row/col windows of x (a cheap gather over the *small* input).
    xk = x.reshape(NB, CB, LF * H, W).astype(compute_dtype)
    if ridx is not None:
        xk = jnp.take(xk, jnp.asarray(ridx, np.int32), axis=2)
    if cidx is not None:
        xk = jnp.take(xk, jnp.asarray(cidx, np.int32), axis=3)

    ah = jnp.asarray(ah_band, compute_dtype)                              # (n_h, TH, KH)
    aw = jnp.asarray(np.transpose(aw_band, (0, 2, 1)).copy(), compute_dtype)  # (n_w, KW, TW)

    out = pl.pallas_call(
        _make_kernel(CB, compute_dtype),
        out_shape=jax.ShapeDtypeStruct((NB, CB, HT_out, W_out), x.dtype),
        grid_spec=pltpu.PrefetchScalarGridSpec(
            num_scalar_prefetch=0,
            grid=(NB, n_h, n_w),
            in_specs=[
                # banded input window for this (b, h, w) step
                pl.BlockSpec((None, CB, KH, KW), lambda b, h, w: (b, 0, h, w)),
                # constant band matrices: fetched once, resident in VMEM (~1 MiB)
                pl.BlockSpec((n_w, KW, TW), lambda b, h, w: (0, 0, 0)),
                pl.BlockSpec((n_h, TH, KH), lambda b, h, w: (0, 0, 0)),
            ],
            out_specs=pl.BlockSpec((None, CB, TH, TW),
                                   lambda b, h, w: (b, 0, h, w)),
        ),
        compiler_params=pltpu.CompilerParams(
            # every grid step is independent (no carried scratch) -> all
            # axes can be split across TensorCores on v7x.
            dimension_semantics=("parallel", "parallel", "parallel")),
    )(xk, aw, ah)

    # (NB, CB, LF*H_out, W_out) -> (N, C, H_out, W_out): pure reshape, the
    # LF channels were stacked along rows so no transpose is ever needed.
    return out.reshape(N, C, H_out, W_out)


class Upsample:
    """Drop-in equivalent of the PyTorch Upsample module."""

    def __init__(self, kernel, factor=2):
        self.kernel = np.asarray(kernel, np.float64)
        self.factor = factor

    def __call__(self, x):
        return upsample2d(x, self.kernel, self.factor)


# ---------------------------------------------------------------------------
# Pure-numpy reference (mirrors upfirdn2d_native) for the self-check
# ---------------------------------------------------------------------------
def _upfirdn2d_ref(x, k1d, factor):
    x = np.asarray(x, np.float64)
    k1d = np.asarray(k1d, np.float64)
    k2d = np.outer(k1d, k1d)
    k2d = k2d / k2d.sum() * factor ** 2               # make_kernel(k) * factor**2
    Kh, Kw = k2d.shape
    p = Kh - factor
    pad0, pad1 = (p + 1) // 2 + factor - 1, p // 2
    N, C, H, W = x.shape
    u = np.zeros((N, C, H * factor, W * factor))
    u[:, :, ::factor, ::factor] = x
    u = np.pad(u, ((0, 0), (0, 0), (pad0, pad1), (pad0, pad1)))
    kf = k2d[::-1, ::-1]
    Ho = u.shape[2] - Kh + 1
    Wo = u.shape[3] - Kw + 1
    out = np.zeros((N, C, Ho, Wo))
    for i in range(Kh):
        for j in range(Kw):
            out += kf[i, j] * u[:, :, i:i + Ho, j:j + Wo]
    return out


if __name__ == "__main__":
    key = jax.random.PRNGKey(0)
    k1, k2, k3 = jax.random.split(key, 3)

    # 1) module-sized example, default bf16-operand path
    x1 = jax.random.normal(k1, (2, 4, 16, 16), jnp.float32)
    up = Upsample(kernel=[1, 3, 3, 1], factor=2)
    y1 = up(x1)
    jax.block_until_ready(y1)
    assert y1.shape == (2, 4, 32, 32), y1.shape
    ref1 = _upfirdn2d_ref(np.asarray(x1), [1, 3, 3, 1], 2)
    err1 = float(np.max(np.abs(np.asarray(y1, np.float64) - ref1)))
    assert err1 < 8e-2, f"bf16 path max abs error {err1}"

    # same input, f32 compute path (tight tolerance)
    y1f = upsample2d(x1, (1, 3, 3, 1), 2, compute_dtype=jnp.float32)
    jax.block_until_ready(y1f)
    err1f = float(np.max(np.abs(np.asarray(y1f, np.float64) - ref1)))
    assert err1f < 5e-3, f"f32 path max abs error {err1f}"

    # 2) multiple row tiles + channel block (n_h > 1, CB > 1, row unfolding)
    x2 = jax.random.normal(k2, (1, 8, 64, 32), jnp.float32)
    y2 = upsample2d(x2, (1, 3, 3, 1), 2, compute_dtype=jnp.float32, th_cap=64)
    jax.block_until_ready(y2)
    ref2 = _upfirdn2d_ref(np.asarray(x2), [1, 3, 3, 1], 2)
    err2 = float(np.max(np.abs(np.asarray(y2, np.float64) - ref2)))
    assert y2.shape == (1, 8, 128, 64)
    assert err2 < 5e-3, f"row-tiled path max abs error {err2}"

    # 3) multiple column tiles (n_w > 1, column unfolding, banded width)
    x3 = jax.random.normal(k3, (1, 2, 16, 256), jnp.float32)
    y3 = upsample2d(x3, (1, 3, 3, 1), 2, compute_dtype=jnp.float32, tw_cap=128)
    jax.block_until_ready(y3)
    ref3 = _upfirdn2d_ref(np.asarray(x3), [1, 3, 3, 1], 2)
    err3 = float(np.max(np.abs(np.asarray(y3, np.float64) - ref3)))
    assert y3.shape == (1, 2, 32, 512)
    assert err3 < 5e-3, f"col-tiled path max abs error {err3}"

    print("KERNEL_OK")
</pallas_src>

<mosaic_0001>
module attributes {stable_mosaic.version = 11 : i64} {
  func.func @kernel(%arg0: i32, %arg1: i32, %arg2: i32, %arg3: memref<1x1x128x16xbf16, #tpu.memory_space<vmem>>, %arg4: memref<1x16x32xbf16, #tpu.memory_space<vmem>>, %arg5: memref<1x256x128xbf16, #tpu.memory_space<vmem>>, %arg6: memref<1x1x256x32xf32, #tpu.memory_space<vmem>>) attributes {dimension_semantics = [#tpu.dimension_semantics<parallel>, #tpu.dimension_semantics<parallel>, #tpu.dimension_semantics<parallel>], iteration_bounds = array<i64: 1, 1, 1>, scalar_prefetch = 0 : i64, scratch_operands = 0 : i64, tpu.core_type = #tpu.core_type<tc>, window_params = [{transform_indices = @transform_0, window_bounds = array<i64: 1, 1, 128, 16>}, {pipeline_mode = #tpu.pipeline_mode<synchronous>, transform_indices = @transform_1, window_bounds = array<i64: 1, 16, 32>}, {pipeline_mode = #tpu.pipeline_mode<synchronous>, transform_indices = @transform_2, window_bounds = array<i64: 1, 256, 128>}, {transform_indices = @transform_3, window_bounds = array<i64: 1, 1, 256, 32>}]} {
    %0 = arith.index_cast %arg1 : i32 to index
    %c0 = arith.constant 0 : index
    %c0_0 = arith.constant 0 : index
    %1 = vector.load %arg5[%0, %c0, %c0_0] : memref<1x256x128xbf16, #tpu.memory_space<vmem>>, vector<1x256x128xbf16>
    %2 = vector.shape_cast %1 : vector<1x256x128xbf16> to vector<256x128xbf16>
    %3 = arith.index_cast %arg2 : i32 to index
    %c0_1 = arith.constant 0 : index
    %c0_2 = arith.constant 0 : index
    %4 = vector.load %arg4[%3, %c0_1, %c0_2] : memref<1x16x32xbf16, #tpu.memory_space<vmem>>, vector<1x16x32xbf16>
    %5 = vector.shape_cast %4 : vector<1x16x32xbf16> to vector<16x32xbf16>
    %c0_3 = arith.constant 0 : index
    %c0_4 = arith.constant 0 : index
    %c0_5 = arith.constant 0 : index
    %c0_6 = arith.constant 0 : index
    %6 = vector.load %arg3[%c0_3, %c0_4, %c0_5, %c0_6] : memref<1x1x128x16xbf16, #tpu.memory_space<vmem>>, vector<1x1x128x16xbf16>
    %7 = vector.shape_cast %6 : vector<1x1x128x16xbf16> to vector<128x16xbf16>
    %cst = arith.constant dense<0.000000e+00> : vector<128x32xf32>
    %8 = tpu.matmul %7, %5, %cst {dimension_numbers = #tpu.dot_dimension_numbers<[1], [0], [0], [1], [0, 0, 1, 1], [], []>} : vector<128x16xbf16>, vector<16x32xbf16>, vector<128x32xf32> -> vector<128x32xf32>
    %9 = arith.truncf %8 : vector<128x32xf32> to vector<128x32xbf16>
    %cst_7 = arith.constant dense<0.000000e+00> : vector<256x32xf32>
    %10 = tpu.matmul %2, %9, %cst_7 {dimension_numbers = #tpu.dot_dimension_numbers<[1], [0], [0], [1], [0, 0, 1, 1], [], []>} : vector<256x128xbf16>, vector<128x32xbf16>, vector<256x32xf32> -> vector<256x32xf32>
    %c0_8 = arith.constant 0 : index
    %c0_9 = arith.constant 0 : index
    %c0_10 = arith.constant 0 : index
    %c0_11 = arith.constant 0 : index
    %11 = vector.load %arg6[%c0_8, %c0_9, %c0_10, %c0_11] : memref<1x1x256x32xf32, #tpu.memory_space<vmem>>, vector<1x1x256x32xf32>
    %12 = vector.shape_cast %11 : vector<1x1x256x32xf32> to vector<256x32xf32>
    %13 = vector.shape_cast %10 : vector<256x32xf32> to vector<1x1x256x32xf32>
    tpu.vector_store %arg6[%c0_8, %c0_9, %c0_10, %c0_11], %13 {strides = array<i32>} : memref<1x1x256x32xf32, #tpu.memory_space<vmem>>, vector<1x1x256x32xf32>,
    return
  }
  func.func @transform_0(%arg0: i32, %arg1: i32, %arg2: i32) -> (i32, i32, i32, i32) {
    %c0_i32 = arith.constant 0 : i32
    %c0_i32_0 = arith.constant 0 : i32
    return %arg0, %c0_i32, %arg1, %arg2 : i32, i32, i32, i32
  }
  func.func @transform_1(%arg0: i32, %arg1: i32, %arg2: i32) -> (i32, i32, i32) {
    %c0_i32 = arith.constant 0 : i32
    %c0_i32_0 = arith.constant 0 : i32
    %c0_i32_1 = arith.constant 0 : i32
    %c0_i32_2 = arith.constant 0 : i32
    return %c0_i32, %c0_i32_0, %c0_i32_1 : i32, i32, i32
  }
  func.func @transform_2(%arg0: i32, %arg1: i32, %arg2: i32) -> (i32, i32, i32) {
    %c0_i32 = arith.constant 0 : i32
    %c0_i32_0 = arith.constant 0 : i32
    %c0_i32_1 = arith.constant 0 : i32
    %c0_i32_2 = arith.constant 0 : i32
    return %c0_i32, %c0_i32_0, %c0_i32_1 : i32, i32, i32
  }
  func.func @transform_3(%arg0: i32, %arg1: i32, %arg2: i32) -> (i32, i32, i32, i32) {
    %c0_i32 = arith.constant 0 : i32
    %c0_i32_0 = arith.constant 0 : i32
    return %arg0, %c0_i32, %arg1, %arg2 : i32, i32, i32, i32
  }
}

</mosaic_0001>

<llo_original>
// kernel: tpu_custom_call.1
$region0: #{tpu_custom_call.1}
  #allocation0 [shape = 'u32[]', space=smem, size = 0x4, offset = 0x4, fixed_abs, tag = 'smem constant byte address 0x4 - core index']
  #allocation1 [shape = 'u32[144,128]{1,0:T(1,128)}', space=vmem, size = 0x12000, scoped, tag = 'internal scratch']
  %s0 = inlined_call_operand.vmem [shape: bf16[1,1,128,16], index: 0, kind: input, shape index: {}]
  %s1 = inlined_call_operand.vmem [shape: bf16[1,16,32], index: 1, kind: input, shape index: {}]
  %s2 = inlined_call_operand.hbm [shape: bf16[1,256,128], index: 2, kind: input, shape index: {}]
  %s3 = inlined_call_operand.vmem [shape: f32[1,1,256,32], index: 3, kind: output, shape index: {}]
  %s4 = sld [smem:[#allocation0]]
  $region26: #{tpu_custom_call.1} parent=0
    _
  %s6 = ssub.s32 1, %s4
  %s7 = scalar_select 0, %s6, %s4
  $region1: #{tpu_custom_call.1} parent=0
    #allocation2 [shape = 'u8[65536]{0}', space=vmem, size = 0x10000, scoped, tag = 'input window, operand 2, single buffered']
    #allocation3 [shape = 's32[1]{0}', space=sflag, size = 0x4, scoped, tag = 'scoped memory for tpu_custom_call.1']
    %8 = vsyncpa [#allocation3], 0
    // Predicated region
    $region2: #{tpu_custom_call.1} parent=1 // pred_check
      _
    $region3: #{tpu_custom_call.1} parent=1 // pred_check_branch
      %10 = sbr.rel (0) target = $region5
    $region4: #{tpu_custom_call.1} parent=1 // pred_region
      _
    $region5: #{tpu_custom_call.1} parent=1 // pred_fallthru
      _
    // Predicated region
    $region6: #{tpu_custom_call.1} parent=1 // pred_check
      _
    $region7: #{tpu_custom_call.1} parent=1 // pred_check_branch
      %12 = sbr.rel (0) target = $region9
    $region8: #{tpu_custom_call.1} parent=1 // pred_region
      _
    $region9: #{tpu_custom_call.1} parent=1 // pred_fallthru
      _
    // Predicated region
    $region10: #{tpu_custom_call.1} parent=1 // pred_check
      _
    $region11: #{tpu_custom_call.1} parent=1 // pred_check_branch
      %14 = sbr.rel (0) target = $region13
    $region12: #{tpu_custom_call.1} parent=1 // pred_region
      %s16 = ssub.s32 2048, 2048
      %17 = vsyncadd [#allocation3], %s16
      %s18 = sshll.u32 [#allocation2], 4
      %s19 = int_to_ptr.vmem [resolvable:$true] %s18
      %24 = dma.hbm_to_vmem [thread:$0]  %s2, 2048, %s19, [#allocation3], 64, 64, 4
    $region13: #{tpu_custom_call.1} parent=1 // pred_fallthru
      _
    // Predicated region
    $region14: #{tpu_custom_call.1} parent=1 // pred_check
      _
    $region15: #{tpu_custom_call.1} parent=1 // pred_check_branch
      %26 = sbr.rel (0) target = $region17
    $region16: #{tpu_custom_call.1} parent=1 // pred_region
      %27 = dma.done [#allocation3], 2048
    $region17: #{tpu_custom_call.1} parent=1 // pred_fallthru
      _
    %s29 = smul.u32 0, 32
    %s30 = smul.addr %s29, 4
    %s31 = scalar_lea.vmem [#allocation2], %s30
    %v32 = vld [vmem:[%s31] sm:$0xf]
    %v33 = vld [vmem:[%s31 + $0x4] sm:$0xf]
    %v34 = vld [vmem:[%s31 + $0x8] sm:$0xf]
    %v35 = vld [vmem:[%s31 + $0xc] sm:$0xf]
    %v36 = vld [vmem:[%s31 + $0x10] sm:$0xf]
    %v37 = vld [vmem:[%s31 + $0x14] sm:$0xf]
    %v38 = vld [vmem:[%s31 + $0x18] sm:$0xf]
    %v39 = vld [vmem:[%s31 + $0x1c] sm:$0xf]
    %v40 = vld [vmem:[%s31 + $0x20] sm:$0xf]
    %v41 = vld [vmem:[%s31 + $0x24] sm:$0xf]
    %v42 = vld [vmem:[%s31 + $0x28] sm:$0xf]
    %v43 = vld [vmem:[%s31 + $0x2c] sm:$0xf]
    %v44 = vld [vmem:[%s31 + $0x30] sm:$0xf]
    %v45 = vld [vmem:[%s31 + $0x34] sm:$0xf]
    %v46 = vld [vmem:[%s31 + $0x38] sm:$0xf]
    %v47 = vld [vmem:[%s31 + $0x3c] sm:$0xf]
    %v48 = vld [vmem:[%s31 + $0x40] sm:$0xf]
    %v49 = vld [vmem:[%s31 + $0x44] sm:$0xf]
    %v50 = vld [vmem:[%s31 + $0x48] sm:$0xf]
    %v51 = vld [vmem:[%s31 + $0x4c] sm:$0xf]
    %v52 = vld [vmem:[%s31 + $0x50] sm:$0xf]
    %v53 = vld [vmem:[%s31 + $0x54] sm:$0xf]
    %v54 = vld [vmem:[%s31 + $0x58] sm:$0xf]
    %v55 = vld [vmem:[%s31 + $0x5c] sm:$0xf]
    %v56 = vld [vmem:[%s31 + $0x60] sm:$0xf]
    %v57 = vld [vmem:[%s31 + $0x64] sm:$0xf]
    %v58 = vld [vmem:[%s31 + $0x68] sm:$0xf]
    %v59 = vld [vmem:[%s31 + $0x6c] sm:$0xf]
    %v60 = vld [vmem:[%s31 + $0x70] sm:$0xf]
    %v61 = vld [vmem:[%s31 + $0x74] sm:$0xf]
    %v62 = vld [vmem:[%s31 + $0x78] sm:$0xf]
    %v63 = vld [vmem:[%s31 + $0x7c] sm:$0xf]
    %s64 = smul.u32 0, 2
    %s65 = smul.addr %s64, 4
    %s66 = scalar_lea.vmem %s1, %s65
    %v67 = vld [vmem:[%s66] sm:$0xf]
    %v68 = vld [vmem:[%s66 + $0x4] sm:$0xf]
    %v69 = vld [vmem:[%s0] sm:$0xf]
    %v70 = vld [vmem:[%s0 + $0x4] sm:$0xf]
    %v71 = vld [vmem:[%s0 + $0x8] sm:$0xf]
    %v72 = vld [vmem:[%s0 + $0xc] sm:$0xf]
    %v73 = vld [vmem:[%s0 + $0x10] sm:$0xf]
    %v74 = vld [vmem:[%s0 + $0x14] sm:$0xf]
    %v75 = vld [vmem:[%s0 + $0x18] sm:$0xf]
    %v76 = vld [vmem:[%s0 + $0x1c] sm:$0xf]
    %v77 = vld [vmem:[%s0 + $0x20] sm:$0xf]
    %v78 = vld [vmem:[%s0 + $0x24] sm:$0xf]
    %v79 = vld [vmem:[%s0 + $0x28] sm:$0xf]
    %v80 = vld [vmem:[%s0 + $0x2c] sm:$0xf]
    %v81 = vld [vmem:[%s0 + $0x30] sm:$0xf]
    %v82 = vld [vmem:[%s0 + $0x34] sm:$0xf]
    %v83 = vld [vmem:[%s0 + $0x38] sm:$0xf]
    %v84 = vld [vmem:[%s0 + $0x3c] sm:$0xf]
    %v101 = vunpack.c.l.b16 %v69
    %v102 = vunpack.c.l.b16 %v70
    %v103 = vunpack.c.l.b16 %v71
    %v104 = vunpack.c.l.b16 %v72
    %v105 = vunpack.c.l.b16 %v73
    %v106 = vunpack.c.l.b16 %v74
    %v107 = vunpack.c.l.b16 %v75
    %v108 = vunpack.c.l.b16 %v76
    %v109 = vunpack.c.l.b16 %v77
    %v110 = vunpack.c.l.b16 %v78
    %v111 = vunpack.c.l.b16 %v79
    %v112 = vunpack.c.l.b16 %v80
    %v113 = vunpack.c.l.b16 %v81
    %v114 = vunpack.c.l.b16 %v82
    %v115 = vunpack.c.l.b16 %v83
    %v116 = vunpack.c.l.b16 %v84
    %v117 = vpack.c.b16 %v102, %v101
    %v118 = vpack.c.b16 %v104, %v103
    %v119 = vpack.c.b16 %v106, %v105
    %v120 = vpack.c.b16 %v108, %v107
    %v121 = vpack.c.b16 %v110, %v109
    %v122 = vpack.c.b16 %v112, %v111
    %v123 = vpack.c.b16 %v114, %v113
    %v124 = vpack.c.b16 %v116, %v115
    %v127 = vunpack.c.l.b16 %v67
    %v128 = vunpack.c.l.b16 %v68
    %v129 = vpack.c.b16 %v128, %v127
    %vm131 = vcmask 130048
    %v133 = vsel %vm131, %v117, 0
    %v136 = vsel %vm131, %v118, 0
    %v139 = vsel %vm131, %v119, 0
    %v142 = vsel %vm131, %v120, 0
    %v145 = vsel %vm131, %v121, 0
    %v148 = vsel %vm131, %v122, 0
    %v151 = vsel %vm131, %v123, 0
    %v154 = vsel %vm131, %v124, 0
    %156 = vmatprep.subr.bf16.mxu0 0
    %157 = vmatpush1.bf16.msra.mxu0 0
    %158 = vmatprep.subr.bf16.mxu0 0
    %159 = vmatpush1.bf16.msra.mxu0 0
    %160 = vmatprep.subr.bf16.mxu0 0
    %161 = vmatpush1.bf16.msra.mxu0 0
    %162 = vmatprep.subr.bf16.mxu0 0
    %163 = vmatpush1.bf16.msra.mxu0 0
    %164 = vmatprep.subr.bf16.mxu0 0
    %165 = vmatpush1.bf16.msra.mxu0 0
    %166 = vmatprep.subr.bf16.mxu0 0
    %167 = vmatpush1.bf16.msra.mxu0 0
    %168 = vmatprep.subr.bf16.mxu0 0
    %169 = vmatpush1.bf16.msra.mxu0 0
    %170 = vmatprep.subr.bf16.mxu0 0
    %171 = vmatpush1.bf16.msra.mxu0 %v129
    %172 = vmatprep.subr.bf16.mxu0 0
    %173 = vmatpush2.bf16.msra.mxu0 0
    %174 = vmatprep.subr.bf16.mxu0 0
    %175 = vmatpush2.bf16.msra.mxu0 0
    %176 = vmatprep.subr.bf16.mxu0 0
    %177 = vmatpush2.bf16.msra.mxu0 0
    %178 = vmatprep.subr.bf16.mxu0 0
    %179 = vmatpush2.bf16.msra.mxu0 0
    %180 = vmatprep.subr.bf16.mxu0 0
    %181 = vmatpush2.bf16.msra.mxu0 0
    %182 = vmatprep.subr.bf16.mxu0 0
    %183 = vmatpush2.bf16.msra.mxu0 0
    %184 = vmatprep.subr.bf16.mxu0 0
    %185 = vmatpush2.bf16.msra.mxu0 0
    %186 = vmatprep.subr.bf16.mxu0 0
    %187 = vmatpush2.bf16.msra.mxu0 0
    %188 = vmatprep.mubr.bf16.mxu0 0
    %189 = vmatmul.mubr.bf16.gmra.mxu0 %v133
    %v190 = vpop.f32.mrf.mxu0
    %v191 = vadd.f32 0.0, %v190
    %v192 = vpop.f32.mrf.mxu0
    %v193 = vpop.f32.mrf.mxu0
    %v194 = vadd.f32 0.0, %v193
    %v195 = vpop.f32.mrf.mxu0
    %196 = vmatprep.mubr.bf16.mxu0 0
    %197 = vmatmul.mubr.bf16.gmra.mxu0 %v136
    %v198 = vpop.f32.mrf.mxu0
    %v199 = vadd.f32 0.0, %v198
    %v200 = vpop.f32.mrf.mxu0
    %v201 = vpop.f32.mrf.mxu0
    %v202 = vadd.f32 0.0, %v201
    %v203 = vpop.f32.mrf.mxu0
    %204 = vmatprep.mubr.bf16.mxu0 0
    %205 = vmatmul.mubr.bf16.gmra.mxu0 %v139
    %v206 = vpop.f32.mrf.mxu0
    %v207 = vadd.f32 0.0, %v206
    %v208 = vpop.f32.mrf.mxu0
    %v209 = vpop.f32.mrf.mxu0
    %v210 = vadd.f32 0.0, %v209
    %v211 = vpop.f32.mrf.mxu0
    %212 = vmatprep.mubr.bf16.mxu0 0
    %213 = vmatmul.mubr.bf16.gmra.mxu0 %v142
    %v214 = vpop.f32.mrf.mxu0
    %v215 = vadd.f32 0.0, %v214
    %v216 = vpop.f32.mrf.mxu0
    %v217 = vpop.f32.mrf.mxu0
    %v218 = vadd.f32 0.0, %v217
    %v219 = vpop.f32.mrf.mxu0
    %220 = vmatprep.mubr.bf16.mxu0 0
    %221 = vmatmul.mubr.bf16.gmra.mxu0 %v145
    %v222 = vpop.f32.mrf.mxu0
    %v223 = vadd.f32 0.0, %v222
    %v224 = vpop.f32.mrf.mxu0
    %v225 = vpop.f32.mrf.mxu0
    %v226 = vadd.f32 0.0, %v225
    %v227 = vpop.f32.mrf.mxu0
    %228 = vmatprep.mubr.bf16.mxu0 0
    %229 = vmatmul.mubr.bf16.gmra.mxu0 %v148
    %v230 = vpop.f32.mrf.mxu0
    %v231 = vadd.f32 0.0, %v230
    %v232 = vpop.f32.mrf.mxu0
    %v233 = vpop.f32.mrf.mxu0
    %v234 = vadd.f32 0.0, %v233
    %v235 = vpop.f32.mrf.mxu0
    %236 = vmatprep.mubr.bf16.mxu0 0
    %237 = vmatmul.mubr.bf16.gmra.mxu0 %v151
    %v238 = vpop.f32.mrf.mxu0
    %v239 = vadd.f32 0.0, %v238
    %v240 = vpop.f32.mrf.mxu0
    %v241 = vpop.f32.mrf.mxu0
    %v242 = vadd.f32 0.0, %v241
    %v243 = vpop.f32.mrf.mxu0
    %244 = vmatprep.mubr.bf16.mxu0 0
    %245 = vmatmul.mubr.bf16.gmra.mxu0 %v154
    %v246 = vpop.f32.mrf.mxu0
    %v247 = vadd.f32 0.0, %v246
    %v248 = vpop.f32.mrf.mxu0
    %v249 = vpop.f32.mrf.mxu0
    %v250 = vadd.f32 0.0, %v249
    %v251 = vpop.f32.mrf.mxu0
    %252 = vdwg.mxu0
    %v253 = vpack.c.bf16 %v194, %v191
    %v254 = vpack.c.bf16 %v202, %v199
    %v255 = vpack.c.bf16 %v210, %v207
    %v256 = vpack.c.bf16 %v218, %v215
    %v257 = vpack.c.bf16 %v226, %v223
    %v258 = vpack.c.bf16 %v234, %v231
    %v259 = vpack.c.bf16 %v242, %v239
    %v260 = vpack.c.bf16 %v250, %v247
    %v293 = vunpack.c.l.b16 %v32
    %v294 = vunpack.c.l.b16 %v33
    %v295 = vunpack.c.l.b16 %v34
    %v296 = vunpack.c.l.b16 %v35
    %v297 = vunpack.c.l.b16 %v36
    %v298 = vunpack.c.l.b16 %v37
    %v299 = vunpack.c.l.b16 %v38
    %v300 = vunpack.c.l.b16 %v39
    %v301 = vunpack.c.l.b16 %v40
    %v302 = vunpack.c.l.b16 %v41
    %v303 = vunpack.c.l.b16 %v42
    %v304 = vunpack.c.l.b16 %v43
    %v305 = vunpack.c.l.b16 %v44
    %v306 = vunpack.c.l.b16 %v45
    %v307 = vunpack.c.l.b16 %v46
    %v308 = vunpack.c.l.b16 %v47
    %v309 = vunpack.c.l.b16 %v48
    %v310 = vunpack.c.l.b16 %v49
    %v311 = vunpack.c.l.b16 %v50
    %v312 = vunpack.c.l.b16 %v51
    %v313 = vunpack.c.l.b16 %v52
    %v314 = vunpack.c.l.b16 %v53
    %v315 = vunpack.c.l.b16 %v54
    %v316 = vunpack.c.l.b16 %v55
    %v317 = vunpack.c.l.b16 %v56
    %v318 = vunpack.c.l.b16 %v57
    %v319 = vunpack.c.l.b16 %v58
    %v320 = vunpack.c.l.b16 %v59
    %v321 = vunpack.c.l.b16 %v60
    %v322 = vunpack.c.l.b16 %v61
    %v323 = vunpack.c.l.b16 %v62
    %v324 = vunpack.c.l.b16 %v63
    %v325 = vpack.c.b16 %v294, %v293
    %v326 = vpack.c.b16 %v296, %v295
    %v327 = vpack.c.b16 %v298, %v297
    %v328 = vpack.c.b16 %v300, %v299
    %v329 = vpack.c.b16 %v302, %v301
    %v330 = vpack.c.b16 %v304, %v303
    %v331 = vpack.c.b16 %v306, %v305
    %v332 = vpack.c.b16 %v308, %v307
    %v333 = vpack.c.b16 %v310, %v309
    %v334 = vpack.c.b16 %v312, %v311
    %v335 = vpack.c.b16 %v314, %v313
    %v336 = vpack.c.b16 %v316, %v315
    %v337 = vpack.c.b16 %v318, %v317
    %v338 = vpack.c.b16 %v320, %v319
    %v339 = vpack.c.b16 %v322, %v321
    %v340 = vpack.c.b16 %v324, %v323
    %357 = vmatprep.subr.bf16.mxu0 0
    %358 = vmatpush1.bf16.msra.mxu0 %v260
    %359 = vmatprep.subr.bf16.mxu0 0
    %360 = vmatpush1.bf16.msra.mxu0 %v259
    %361 = vmatprep.subr.bf16.mxu0 0
    %362 = vmatpush1.bf16.msra.mxu0 %v258
    %363 = vmatprep.subr.bf16.mxu0 0
    %364 = vmatpush1.bf16.msra.mxu0 %v257
    %365 = vmatprep.subr.bf16.mxu0 0
    %366 = vmatpush1.bf16.msra.mxu0 %v256
    %367 = vmatprep.subr.bf16.mxu0 0
    %368 = vmatpush1.bf16.msra.mxu0 %v255
    %369 = vmatprep.subr.bf16.mxu0 0
    %370 = vmatpush1.bf16.msra.mxu0 %v254
    %371 = vmatprep.subr.bf16.mxu0 0
    %372 = vmatpush1.bf16.msra.mxu0 %v253
    %373 = vmatprep.subr.bf16.mxu0 0
    %374 = vmatpush2.bf16.msra.mxu0 0
    %375 = vmatprep.subr.bf16.mxu0 0
    %376 = vmatpush2.bf16.msra.mxu0 0
    %377 = vmatprep.subr.bf16.mxu0 0
    %378 = vmatpush2.bf16.msra.mxu0 0
    %379 = vmatprep.subr.bf16.mxu0 0
    %380 = vmatpush2.bf16.msra.mxu0 0
    %381 = vmatprep.subr.bf16.mxu0 0
    %382 = vmatpush2.bf16.msra.mxu0 0
    %383 = vmatprep.subr.bf16.mxu0 0
    %384 = vmatpush2.bf16.msra.mxu0 0
    %385 = vmatprep.subr.bf16.mxu0 0
    %386 = vmatpush2.bf16.msra.mxu0 0
    %387 = vmatprep.subr.bf16.mxu0 0
    %388 = vmatpush2.bf16.msra.mxu0 0
    %389 = vmatprep.mubr.bf16.mxu0 0
    %390 = vmatmul.mubr.bf16.gmra.mxu0 %v325
    %v391 = vpop.f32.mrf.mxu0
    %v392 = vadd.f32 0.0, %v391
    %v393 = vpop.f32.mrf.mxu0
    %v394 = vpop.f32.mrf.mxu0
    %v395 = vadd.f32 0.0, %v394
    %v396 = vpop.f32.mrf.mxu0
    %397 = vmatprep.mubr.bf16.mxu0 0
    %398 = vmatmul.mubr.bf16.gmra.mxu0 %v326
    %v399 = vpop.f32.mrf.mxu0
    %v400 = vadd.f32 0.0, %v399
    %v401 = vpop.f32.mrf.mxu0
    %v402 = vpop.f32.mrf.mxu0
    %v403 = vadd.f32 0.0, %v402
    %v404 = vpop.f32.mrf.mxu0
    %405 = vmatprep.mubr.bf16.mxu0 0
    %406 = vmatmul.mubr.bf16.gmra.mxu0 %v327
    %v407 = vpop.f32.mrf.mxu0
    %v408 = vadd.f32 0.0, %v407
    %v409 = vpop.f32.mrf.mxu0
    %v410 = vpop.f32.mrf.mxu0
    %v411 = vadd.f32 0.0, %v410
    %v412 = vpop.f32.mrf.mxu0
    %413 = vmatprep.mubr.bf16.mxu0 0
    %414 = vmatmul.mubr.bf16.gmra.mxu0 %v328
    %v415 = vpop.f32.mrf.mxu0
    %v416 = vadd.f32 0.0, %v415
    %v417 = vpop.f32.mrf.mxu0
    %v418 = vpop.f32.mrf.mxu0
    %v419 = vadd.f32 0.0, %v418
    %v420 = vpop.f32.mrf.mxu0
    %421 = vmatprep.mubr.bf16.mxu0 0
    %422 = vmatmul.mubr.bf16.gmra.mxu0 %v329
    %v423 = vpop.f32.mrf.mxu0
    %v424 = vadd.f32 0.0, %v423
    %v425 = vpop.f32.mrf.mxu0
    %v426 = vpop.f32.mrf.mxu0
    %v427 = vadd.f32 0.0, %v426
    %v428 = vpop.f32.mrf.mxu0
    %429 = vmatprep.mubr.bf16.mxu0 0
    %430 = vmatmul.mubr.bf16.gmra.mxu0 %v330
    %v431 = vpop.f32.mrf.mxu0
    %v432 = vadd.f32 0.0, %v431
    %v433 = vpop.f32.mrf.mxu0
    %v434 = vpop.f32.mrf.mxu0
    %v435 = vadd.f32 0.0, %v434
    %v436 = vpop.f32.mrf.mxu0
    %437 = vmatprep.mubr.bf16.mxu0 0
    %438 = vmatmul.mubr.bf16.gmra.mxu0 %v331
    %v439 = vpop.f32.mrf.mxu0
    %v440 = vadd.f32 0.0, %v439
    %v441 = vpop.f32.mrf.mxu0
    %v442 = vpop.f32.mrf.mxu0
    %v443 = vadd.f32 0.0, %v442
    %v444 = vpop.f32.mrf.mxu0
    %445 = vmatprep.mubr.bf16.mxu0 0
    %446 = vmatmul.mubr.bf16.gmra.mxu0 %v332
    %v447 = vpop.f32.mrf.mxu0
    %v448 = vadd.f32 0.0, %v447
    %v449 = vpop.f32.mrf.mxu0
    %v450 = vpop.f32.mrf.mxu0
    %v451 = vadd.f32 0.0, %v450
    %v452 = vpop.f32.mrf.mxu0
    %453 = vmatprep.mubr.bf16.mxu0 0
    %454 = vmatmul.mubr.bf16.gmra.mxu0 %v333
    %v455 = vpop.f32.mrf.mxu0
    %v456 = vadd.f32 0.0, %v455
    %v457 = vpop.f32.mrf.mxu0
    %v458 = vpop.f32.mrf.mxu0
    %v459 = vadd.f32 0.0, %v458
    %v460 = vpop.f32.mrf.mxu0
    %461 = vmatprep.mubr.bf16.mxu0 0
    %462 = vmatmul.mubr.bf16.gmra.mxu0 %v334
    %v463 = vpop.f32.mrf.mxu0
    %v464 = vadd.f32 0.0, %v463
    %v465 = vpop.f32.mrf.mxu0
    %v466 = vpop.f32.mrf.mxu0
    %v467 = vadd.f32 0.0, %v466
    %v468 = vpop.f32.mrf.mxu0
    %469 = vmatprep.mubr.bf16.mxu0 0
    %470 = vmatmul.mubr.bf16.gmra.mxu0 %v335
    %v471 = vpop.f32.mrf.mxu0
    %v472 = vadd.f32 0.0, %v471
    %v473 = vpop.f32.mrf.mxu0
    %v474 = vpop.f32.mrf.mxu0
    %v475 = vadd.f32 0.0, %v474
    %v476 = vpop.f32.mrf.mxu0
    %477 = vmatprep.mubr.bf16.mxu0 0
    %478 = vmatmul.mubr.bf16.gmra.mxu0 %v336
    %v479 = vpop.f32.mrf.mxu0
    %v480 = vadd.f32 0.0, %v479
    %v481 = vpop.f32.mrf.mxu0
    %v482 = vpop.f32.mrf.mxu0
    %v483 = vadd.f32 0.0, %v482
    %v484 = vpop.f32.mrf.mxu0
    %485 = vmatprep.mubr.bf16.mxu0 0
    %486 = vmatmul.mubr.bf16.gmra.mxu0 %v337
    %v487 = vpop.f32.mrf.mxu0
    %v488 = vadd.f32 0.0, %v487
    %v489 = vpop.f32.mrf.mxu0
    %v490 = vpop.f32.mrf.mxu0
    %v491 = vadd.f32 0.0, %v490
    %v492 = vpop.f32.mrf.mxu0
    %493 = vmatprep.mubr.bf16.mxu0 0
    %494 = vmatmul.mubr.bf16.gmra.mxu0 %v338
    %v495 = vpop.f32.mrf.mxu0
    %v496 = vadd.f32 0.0, %v495
    %v497 = vpop.f32.mrf.mxu0
    %v498 = vpop.f32.mrf.mxu0
    %v499 = vadd.f32 0.0, %v498
    %v500 = vpop.f32.mrf.mxu0
    %501 = vmatprep.mubr.bf16.mxu0 0
    %502 = vmatmul.mubr.bf16.gmra.mxu0 %v339
    %v503 = vpop.f32.mrf.mxu0
    %v504 = vadd.f32 0.0, %v503
    %v505 = vpop.f32.mrf.mxu0
    %v506 = vpop.f32.mrf.mxu0
    %v507 = vadd.f32 0.0, %v506
    %v508 = vpop.f32.mrf.mxu0
    %509 = vmatprep.mubr.bf16.mxu0 0
    %510 = vmatmul.mubr.bf16.gmra.mxu0 %v340
    %v511 = vpop.f32.mrf.mxu0
    %v512 = vadd.f32 0.0, %v511
    %v513 = vpop.f32.mrf.mxu0
    %v514 = vpop.f32.mrf.mxu0
    %v515 = vadd.f32 0.0, %v514
    %v516 = vpop.f32.mrf.mxu0
    %517 = vdwg.mxu0
    %vm518 = vcmask 261120
    %519 = vst.msk [vmem:[%s3] sm:$0xff] %vm518, %v392
    %520 = vst.msk [vmem:[%s3 + $0x8] sm:$0xff] %vm518, %v395
    %521 = vst.msk [vmem:[%s3 + $0x10] sm:$0xff] %vm518, %v400
    %522 = vst.msk [vmem:[%s3 + $0x18] sm:$0xff] %vm518, %v403
    %523 = vst.msk [vmem:[%s3 + $0x20] sm:$0xff] %vm518, %v408
    %524 = vst.msk [vmem:[%s3 + $0x28] sm:$0xff] %vm518, %v411
    %525 = vst.msk [vmem:[%s3 + $0x30] sm:$0xff] %vm518, %v416
    %526 = vst.msk [vmem:[%s3 + $0x38] sm:$0xff] %vm518, %v419
    %527 = vst.msk [vmem:[%s3 + $0x40] sm:$0xff] %vm518, %v424
    %528 = vst.msk [vmem:[%s3 + $0x48] sm:$0xff] %vm518, %v427
    %529 = vst.msk [vmem:[%s3 + $0x50] sm:$0xff] %vm518, %v432
    %530 = vst.msk [vmem:[%s3 + $0x58] sm:$0xff] %vm518, %v435
    %531 = vst.msk [vmem:[%s3 + $0x60] sm:$0xff] %vm518, %v440
    %532 = vst.msk [vmem:[%s3 + $0x68] sm:$0xff] %vm518, %v443
    %533 = vst.msk [vmem:[%s3 + $0x70] sm:$0xff] %vm518, %v448
    %534 = vst.msk [vmem:[%s3 + $0x78] sm:$0xff] %vm518, %v451
    %535 = vst.msk [vmem:[%s3 + $0x80] sm:$0xff] %vm518, %v456
    %536 = vst.msk [vmem:[%s3 + $0x88] sm:$0xff] %vm518, %v459
    %537 = vst.msk [vmem:[%s3 + $0x90] sm:$0xff] %vm518, %v464
    %538 = vst.msk [vmem:[%s3 + $0x98] sm:$0xff] %vm518, %v467
    %539 = vst.msk [vmem:[%s3 + $0xa0] sm:$0xff] %vm518, %v472
    %540 = vst.msk [vmem:[%s3 + $0xa8] sm:$0xff] %vm518, %v475
    %541 = vst.msk [vmem:[%s3 + $0xb0] sm:$0xff] %vm518, %v480
    %542 = vst.msk [vmem:[%s3 + $0xb8] sm:$0xff] %vm518, %v483
    %543 = vst.msk [vmem:[%s3 + $0xc0] sm:$0xff] %vm518, %v488
    %544 = vst.msk [vmem:[%s3 + $0xc8] sm:$0xff] %vm518, %v491
    %545 = vst.msk [vmem:[%s3 + $0xd0] sm:$0xff] %vm518, %v496
    %546 = vst.msk [vmem:[%s3 + $0xd8] sm:$0xff] %vm518, %v499
    %547 = vst.msk [vmem:[%s3 + $0xe0] sm:$0xff] %vm518, %v504
    %548 = vst.msk [vmem:[%s3 + $0xe8] sm:$0xff] %vm518, %v507
    %549 = vst.msk [vmem:[%s3 + $0xf0] sm:$0xff] %vm518, %v512
    %550 = vst.msk [vmem:[%s3 + $0xf8] sm:$0xff] %vm518, %v515
    // Predicated region
    $region18: #{tpu_custom_call.1} parent=1 // pred_check
      _
    $region19: #{tpu_custom_call.1} parent=1 // pred_check_branch
      %552 = sbr.rel (0) target = $region21
    $region20: #{tpu_custom_call.1} parent=1 // pred_region
      _
    $region21: #{tpu_custom_call.1} parent=1 // pred_fallthru
      _
    // Predicated region
    $region22: #{tpu_custom_call.1} parent=1 // pred_check
      _
    $region23: #{tpu_custom_call.1} parent=1 // pred_check_branch
      %554 = sbr.rel (0) target = $region25
    $region24: #{tpu_custom_call.1} parent=1 // pred_region
      _
    $region25: #{tpu_custom_call.1} parent=1 // pred_fallthru
      _
    %555 = vsyncpa [#allocation3], 1

</llo_original>
